<compile_context>
chip_gen: v6e
topology: v6e:2x2x1
jax: 0.10.0
libtpu: 0.0.40
codegen_flags: <defaults>
</compile_context>

<pallas_src>
import functools

import jax
import jax.numpy as jnp
import numpy as np
from jax.experimental import pallas as pl
from jax.experimental.pallas import tpu as pltpu


def _data_window_kernel(window_size, block_b, date_ref, time_ref, data_hbm,
                        out_hbm, vmem, gsem, osem):
    """One grid step = one group of `block_b` windows, fully pipelined.

    date_ref / time_ref : SMEM scalar-prefetch refs, shape [Bp], int32
    data_hbm            : raw HBM ref of the full [D, T, F] data tensor
    out_hbm             : raw HBM ref of the flat (Bp*W, F) output
    vmem                : VMEM staging scratch, shape (2, block_b*W, F)
    gsem                : gather-completion DMA semaphores, shape (2,)
    osem                : writeback-completion DMA semaphores, shape (2,)
    """
    W = window_size
    BB = block_b
    rows = BB * W

    b = pl.program_id(0)
    nb = pl.num_programs(0)
    slot = b % 2
    prev = 1 - slot
    base = b * BB

    def gather_wait_desc(s):
        # Dummy same-shaped descriptor: .wait() only needs (sem, transfer size),
        # so one semaphore per bank serves all BB equally-sized gather copies.
        return pltpu.make_async_copy(
            data_hbm.at[0, pl.ds(0, W), :],
            vmem.at[s, pl.ds(0, W), :],
            gsem.at[s],
        )

    def writeback_copy(s, group):
        return pltpu.make_async_copy(
            vmem.at[s],
            out_hbm.at[pl.ds(group * rows, rows), :],
            osem.at[s],
        )

    # (A) WAR hazard guard: the writeback that still reads vmem[slot]
    # (group b-2, started at step b-1) must finish before this group's
    # gather DMAs overwrite that bank.  Usually already satisfied.
    @pl.when(b >= 2)
    def _():
        writeback_copy(slot, b - 2).wait()

    # (B) Issue this group's BB gather DMAs into vmem[slot].  All scalar reads
    # and DMA starts happen before any further wait, so the BB HBM reads are
    # concurrently in flight and overlap their latency.
    for i in range(BB):                       # static unroll
        d = date_ref[base + i]
        t = time_ref[base + i]
        pltpu.make_async_copy(
            data_hbm.at[d, pl.ds(t - W, W), :],      # window covers [t-W, t)
            vmem.at[slot, pl.ds(i * W, W), :],
            gsem.at[slot],
        ).start()

    # (C+D) Drain the PREVIOUS group's gathers (started a full step ago, so
    # effectively done) and launch its VMEM->HBM writeback — one large,
    # contiguous, lane-dense DMA that overlaps with (B)'s gathers and with
    # the next grid step.
    @pl.when(b >= 1)
    def _():
        for _ in range(BB):
            gather_wait_desc(prev).wait()
        writeback_copy(prev, b - 1).start()

    # (E) Epilogue on the final step: drain this group's gathers, write it
    # back, and wait for every outstanding writeback before the kernel ends.
    @pl.when(b == nb - 1)
    def _():
        for _ in range(BB):
            gather_wait_desc(slot).wait()
        writeback_copy(slot, b).start()
        writeback_copy(slot, b).wait()

    @pl.when((b == nb - 1) & (b >= 1))
    def _():
        writeback_copy(prev, b - 1).wait()


def data_window(data: jax.Array, date_idx: jax.Array, time_idx: jax.Array,
                window_size: int, *, block_b: int = 256) -> jax.Array:
    """Pallas implementation of DataWindow.forward for 1-D batch indices.

    data:      [D, T, F]
    date_idx:  [B] int
    time_idx:  [B] int
    returns:   [B, window_size, F]

    block_b = windows gathered (and DMAs in flight) per grid step.  Keep
    2 * block_b * W * F * itemsize under the scoped VMEM limit (trivially true
    at the default).  256 already saturates HBM on v5e/v6e; raise toward
    512-1024 on v7x if profiling shows headroom.
    """
    assert date_idx.shape == time_idx.shape and date_idx.ndim == 1
    B = date_idx.shape[0]
    D, T, F = data.shape
    W = int(window_size)
    assert B >= 1 and D >= 1 and T >= W, "need D>=1 and T>=window_size"

    BB = max(1, min(int(block_b), B))
    num_blocks = int(pl.cdiv(B, BB))
    Bp = num_blocks * BB

    date_idx = date_idx.astype(jnp.int32)
    time_idx = time_idx.astype(jnp.int32)
    if Bp != B:
        # Pad with safe in-bounds queries (date 0, window [0, W)); padded
        # results are sliced off below.
        pad = Bp - B
        date_idx = jnp.concatenate([date_idx, jnp.zeros((pad,), jnp.int32)])
        time_idx = jnp.concatenate([time_idx, jnp.full((pad,), W, jnp.int32)])

    kernel = functools.partial(_data_window_kernel, W, BB)
    itemsize = jnp.dtype(data.dtype).itemsize

    grid_spec = pltpu.PrefetchScalarGridSpec(
        num_scalar_prefetch=2,            # date_idx, time_idx -> SMEM
        grid=(num_blocks,),
        in_specs=[
            pl.BlockSpec(memory_space=pl.ANY),   # data stays in HBM; manual DMA
        ],
        out_specs=pl.BlockSpec(memory_space=pl.ANY),  # output written by DMA
        scratch_shapes=[
            pltpu.VMEM((2, BB * W, F), data.dtype),   # double-buffered staging
            pltpu.SemaphoreType.DMA((2,)),            # gather sems (per bank)
            pltpu.SemaphoreType.DMA((2,)),            # writeback sems (per bank)
        ],
    )

    out_flat = pl.pallas_call(
        kernel,
        out_shape=jax.ShapeDtypeStruct((Bp * W, F), data.dtype),
        grid_spec=grid_spec,
        compiler_params=pltpu.CompilerParams(
            # DMA state (semaphores, VMEM banks) is carried across grid steps,
            # so the axis must execute sequentially.
            dimension_semantics=("arbitrary",),
        ),
        cost_estimate=pl.CostEstimate(
            flops=0,
            transcendentals=0,
            bytes_accessed=2 * Bp * W * F * itemsize + 2 * Bp * 4,
        ),
    )(date_idx, time_idx, data)

    return out_flat[: B * W].reshape(B, W, F)


if __name__ == "__main__":
    # Small, deterministic example shapes.
    D, T, F = 4, 32, 128     # dates, times, features (F = lane width)
    W = 8                    # window_size
    B = 10                   # batch of (date_idx, time_idx) queries

    key = jax.random.PRNGKey(0)
    k_data, k_date, k_time = jax.random.split(key, 3)

    # The module's "parameter": the stored data tensor (deterministic init).
    data = jax.random.normal(k_data, (D, T, F), dtype=jnp.float32)

    # Query indices. time_idx must be >= W so the window stays in-bounds
    # (same requirement as the PyTorch module for non-wrapping behaviour).
    date_idx = jax.random.randint(k_date, (B,), 0, D, dtype=jnp.int32)
    time_idx = jax.random.randint(k_time, (B,), W, T, dtype=jnp.int32)

    # block_b=4 exercises the multi-step pipelined grid (prologue / steady
    # state / epilogue) and the batch-padding path at this small B.
    out = data_window(data, date_idx, time_idx, W, block_b=4)
    out = jax.block_until_ready(out)

    # Pure-JAX reference reproducing the PyTorch advanced indexing exactly.
    rng = jnp.arange(-W, 0, dtype=jnp.int32)                  # self.range
    time_indices = rng[None, :] + time_idx[:, None]           # [B, W]
    date_indices = date_idx[:, None]                          # [B, 1] (broadcast)
    ref = data[date_indices, time_indices, :]                 # [B, W, F]

    np.testing.assert_allclose(np.asarray(out), np.asarray(ref), rtol=0, atol=0)
    print("KERNEL_OK")
</pallas_src>

<mosaic_0001>
module attributes {stable_mosaic.version = 11 : i64} {
  func.func @_data_window_kernel(%arg0: i32, %arg1: memref<12xi32, #tpu.memory_space<smem>>, %arg2: memref<12xi32, #tpu.memory_space<smem>>, %arg3: memref<4x32x128xf32, #tpu.memory_space<any>>, %arg4: memref<96x128xf32, #tpu.memory_space<any>>, %arg5: memref<2x32x128xf32, #tpu.memory_space<vmem>>, %arg6: memref<2x!tpu.dma_semaphore, #tpu.memory_space<semaphore_mem>>, %arg7: memref<2x!tpu.dma_semaphore, #tpu.memory_space<semaphore_mem>>) attributes {dimension_semantics = [#tpu.dimension_semantics<arbitrary>], iteration_bounds = array<i64: 3>, scalar_prefetch = 2 : i64, scratch_operands = 3 : i64, tpu.core_type = #tpu.core_type<tc>, window_params = [{}, {}]} {
    %c2_i32 = arith.constant 2 : i32
    %c0_i32 = arith.constant 0 : i32
    %0 = arith.cmpi eq, %c2_i32, %c0_i32 : i32
    %c1_i32 = arith.constant 1 : i32
    %1 = arith.select %0, %c1_i32, %c2_i32 : i32
    %2 = arith.remsi %arg0, %1 : i32
    %c0_i32_0 = arith.constant 0 : i32
    %3 = arith.cmpi ne, %2, %c0_i32_0 : i32
    %c0_i32_1 = arith.constant 0 : i32
    %4 = arith.cmpi slt, %2, %c0_i32_1 : i32
    %c0_i32_2 = arith.constant 0 : i32
    %5 = arith.cmpi slt, %1, %c0_i32_2 : i32
    %6 = arith.xori %4, %5 : i1
    %7 = arith.andi %6, %3 : i1
    %8 = arith.addi %2, %1 : i32
    %9 = arith.select %7, %8, %2 : i32
    %c1_i32_3 = arith.constant 1 : i32
    %10 = arith.subi %c1_i32_3, %9 : i32
    %c4_i32 = arith.constant 4 : i32
    %11 = arith.muli %arg0, %c4_i32 : i32
    %c2_i32_4 = arith.constant 2 : i32
    %12 = arith.cmpi sge, %arg0, %c2_i32_4 : i32
    %13 = arith.extui %12 : i1 to i32
    %c0_i32_5 = arith.constant 0 : i32
    %14 = arith.cmpi ne, %13, %c0_i32_5 : i32
    scf.if %14 {
      %c2_i32_33 = arith.constant 2 : i32
      %78 = arith.subi %arg0, %c2_i32_33 : i32
      %c32_i32 = arith.constant 32 : i32
      %79 = arith.muli %78, %c32_i32 : i32
      %c0_i32_34 = arith.constant 0 : i32
      %c0_i32_35 = arith.constant 0 : i32
      %80 = tpu.memref_slice %arg5[%9, %c0_i32_34, %c0_i32_35] : memref<2x32x128xf32, #tpu.memory_space<vmem>> -> memref<1x32x128xf32, #tpu.memory_space<vmem>>
      %81 = tpu.memref_squeeze %80 : memref<1x32x128xf32, #tpu.memory_space<vmem>> -> memref<32x128xf32, #tpu.memory_space<vmem>>
      %c0_i32_36 = arith.constant 0 : i32
      %82 = tpu.memref_slice %arg4[%79, %c0_i32_36] : memref<96x128xf32, #tpu.memory_space<any>> -> memref<32x128xf32, #tpu.memory_space<any>>
      %83 = tpu.memref_slice %arg7[%9] : memref<2x!tpu.dma_semaphore, #tpu.memory_space<semaphore_mem>> -> memref<1x!tpu.dma_semaphore, #tpu.memory_space<semaphore_mem>>
      %84 = tpu.memref_squeeze %83 : memref<1x!tpu.dma_semaphore, #tpu.memory_space<semaphore_mem>> -> memref<!tpu.dma_semaphore, #tpu.memory_space<semaphore_mem>>
      tpu.wait_dma2 semaphore(%84 : memref<!tpu.dma_semaphore, #tpu.memory_space<semaphore_mem>>) src(%81 : memref<32x128xf32, #tpu.memory_space<vmem>>) dst(%82 : memref<32x128xf32, #tpu.memory_space<any>>)
    } else {
    }
    %c0_i32_6 = arith.constant 0 : i32
    %15 = arith.addi %11, %c0_i32_6 : i32
    %16 = arith.index_cast %15 : i32 to index
    %17 = memref.load %arg1[%16] : memref<12xi32, #tpu.memory_space<smem>>
    %c0_i32_7 = arith.constant 0 : i32
    %18 = arith.addi %11, %c0_i32_7 : i32
    %19 = arith.index_cast %18 : i32 to index
    %20 = memref.load %arg2[%19] : memref<12xi32, #tpu.memory_space<smem>>
    %c8_i32 = arith.constant 8 : i32
    %21 = arith.subi %20, %c8_i32 : i32
    %c0_i32_8 = arith.constant 0 : i32
    %22 = tpu.memref_slice %arg3[%17, %21, %c0_i32_8] : memref<4x32x128xf32, #tpu.memory_space<any>> -> memref<1x8x128xf32, #tpu.memory_space<any>>
    %23 = tpu.memref_squeeze %22 : memref<1x8x128xf32, #tpu.memory_space<any>> -> memref<8x128xf32, #tpu.memory_space<any>>
    %c0_i32_9 = arith.constant 0 : i32
    %c0_i32_10 = arith.constant 0 : i32
    %24 = tpu.memref_slice %arg5[%9, %c0_i32_9, %c0_i32_10] : memref<2x32x128xf32, #tpu.memory_space<vmem>> -> memref<1x8x128xf32, #tpu.memory_space<vmem>>
    %25 = tpu.memref_squeeze %24 : memref<1x8x128xf32, #tpu.memory_space<vmem>> -> memref<8x128xf32, #tpu.memory_space<vmem>>
    %26 = tpu.memref_slice %arg6[%9] : memref<2x!tpu.dma_semaphore, #tpu.memory_space<semaphore_mem>> -> memref<1x!tpu.dma_semaphore, #tpu.memory_space<semaphore_mem>>
    %27 = tpu.memref_squeeze %26 : memref<1x!tpu.dma_semaphore, #tpu.memory_space<semaphore_mem>> -> memref<!tpu.dma_semaphore, #tpu.memory_space<semaphore_mem>>
    tpu.enqueue_dma source(%23 : memref<8x128xf32, #tpu.memory_space<any>>) target(%25 : memref<8x128xf32, #tpu.memory_space<vmem>>) target_semaphore(%27 : memref<!tpu.dma_semaphore, #tpu.memory_space<semaphore_mem>>)
    %c1_i32_11 = arith.constant 1 : i32
    %28 = arith.addi %11, %c1_i32_11 : i32
    %29 = arith.index_cast %28 : i32 to index
    %30 = memref.load %arg1[%29] : memref<12xi32, #tpu.memory_space<smem>>
    %c1_i32_12 = arith.constant 1 : i32
    %31 = arith.addi %11, %c1_i32_12 : i32
    %32 = arith.index_cast %31 : i32 to index
    %33 = memref.load %arg2[%32] : memref<12xi32, #tpu.memory_space<smem>>
    %c8_i32_13 = arith.constant 8 : i32
    %34 = arith.subi %33, %c8_i32_13 : i32
    %c0_i32_14 = arith.constant 0 : i32
    %35 = tpu.memref_slice %arg3[%30, %34, %c0_i32_14] : memref<4x32x128xf32, #tpu.memory_space<any>> -> memref<1x8x128xf32, #tpu.memory_space<any>>
    %36 = tpu.memref_squeeze %35 : memref<1x8x128xf32, #tpu.memory_space<any>> -> memref<8x128xf32, #tpu.memory_space<any>>
    %c8_i32_15 = arith.constant 8 : i32
    %c0_i32_16 = arith.constant 0 : i32
    %37 = tpu.memref_slice %arg5[%9, %c8_i32_15, %c0_i32_16] : memref<2x32x128xf32, #tpu.memory_space<vmem>> -> memref<1x8x128xf32, #tpu.memory_space<vmem>>
    %38 = tpu.memref_squeeze %37 : memref<1x8x128xf32, #tpu.memory_space<vmem>> -> memref<8x128xf32, #tpu.memory_space<vmem>>
    %39 = tpu.memref_slice %arg6[%9] : memref<2x!tpu.dma_semaphore, #tpu.memory_space<semaphore_mem>> -> memref<1x!tpu.dma_semaphore, #tpu.memory_space<semaphore_mem>>
    %40 = tpu.memref_squeeze %39 : memref<1x!tpu.dma_semaphore, #tpu.memory_space<semaphore_mem>> -> memref<!tpu.dma_semaphore, #tpu.memory_space<semaphore_mem>>
    tpu.enqueue_dma source(%36 : memref<8x128xf32, #tpu.memory_space<any>>) target(%38 : memref<8x128xf32, #tpu.memory_space<vmem>>) target_semaphore(%40 : memref<!tpu.dma_semaphore, #tpu.memory_space<semaphore_mem>>)
    %c2_i32_17 = arith.constant 2 : i32
    %41 = arith.addi %11, %c2_i32_17 : i32
    %42 = arith.index_cast %41 : i32 to index
    %43 = memref.load %arg1[%42] : memref<12xi32, #tpu.memory_space<smem>>
    %c2_i32_18 = arith.constant 2 : i32
    %44 = arith.addi %11, %c2_i32_18 : i32
    %45 = arith.index_cast %44 : i32 to index
    %46 = memref.load %arg2[%45] : memref<12xi32, #tpu.memory_space<smem>>
    %c8_i32_19 = arith.constant 8 : i32
    %47 = arith.subi %46, %c8_i32_19 : i32
    %c0_i32_20 = arith.constant 0 : i32
    %48 = tpu.memref_slice %arg3[%43, %47, %c0_i32_20] : memref<4x32x128xf32, #tpu.memory_space<any>> -> memref<1x8x128xf32, #tpu.memory_space<any>>
    %49 = tpu.memref_squeeze %48 : memref<1x8x128xf32, #tpu.memory_space<any>> -> memref<8x128xf32, #tpu.memory_space<any>>
    %c16_i32 = arith.constant 16 : i32
    %c0_i32_21 = arith.constant 0 : i32
    %50 = tpu.memref_slice %arg5[%9, %c16_i32, %c0_i32_21] : memref<2x32x128xf32, #tpu.memory_space<vmem>> -> memref<1x8x128xf32, #tpu.memory_space<vmem>>
    %51 = tpu.memref_squeeze %50 : memref<1x8x128xf32, #tpu.memory_space<vmem>> -> memref<8x128xf32, #tpu.memory_space<vmem>>
    %52 = tpu.memref_slice %arg6[%9] : memref<2x!tpu.dma_semaphore, #tpu.memory_space<semaphore_mem>> -> memref<1x!tpu.dma_semaphore, #tpu.memory_space<semaphore_mem>>
    %53 = tpu.memref_squeeze %52 : memref<1x!tpu.dma_semaphore, #tpu.memory_space<semaphore_mem>> -> memref<!tpu.dma_semaphore, #tpu.memory_space<semaphore_mem>>
    tpu.enqueue_dma source(%49 : memref<8x128xf32, #tpu.memory_space<any>>) target(%51 : memref<8x128xf32, #tpu.memory_space<vmem>>) target_semaphore(%53 : memref<!tpu.dma_semaphore, #tpu.memory_space<semaphore_mem>>)
    %c3_i32 = arith.constant 3 : i32
    %54 = arith.addi %11, %c3_i32 : i32
    %55 = arith.index_cast %54 : i32 to index
    %56 = memref.load %arg1[%55] : memref<12xi32, #tpu.memory_space<smem>>
    %c3_i32_22 = arith.constant 3 : i32
    %57 = arith.addi %11, %c3_i32_22 : i32
    %58 = arith.index_cast %57 : i32 to index
    %59 = memref.load %arg2[%58] : memref<12xi32, #tpu.memory_space<smem>>
    %c8_i32_23 = arith.constant 8 : i32
    %60 = arith.subi %59, %c8_i32_23 : i32
    %c0_i32_24 = arith.constant 0 : i32
    %61 = tpu.memref_slice %arg3[%56, %60, %c0_i32_24] : memref<4x32x128xf32, #tpu.memory_space<any>> -> memref<1x8x128xf32, #tpu.memory_space<any>>
    %62 = tpu.memref_squeeze %61 : memref<1x8x128xf32, #tpu.memory_space<any>> -> memref<8x128xf32, #tpu.memory_space<any>>
    %c24_i32 = arith.constant 24 : i32
    %c0_i32_25 = arith.constant 0 : i32
    %63 = tpu.memref_slice %arg5[%9, %c24_i32, %c0_i32_25] : memref<2x32x128xf32, #tpu.memory_space<vmem>> -> memref<1x8x128xf32, #tpu.memory_space<vmem>>
    %64 = tpu.memref_squeeze %63 : memref<1x8x128xf32, #tpu.memory_space<vmem>> -> memref<8x128xf32, #tpu.memory_space<vmem>>
    %65 = tpu.memref_slice %arg6[%9] : memref<2x!tpu.dma_semaphore, #tpu.memory_space<semaphore_mem>> -> memref<1x!tpu.dma_semaphore, #tpu.memory_space<semaphore_mem>>
    %66 = tpu.memref_squeeze %65 : memref<1x!tpu.dma_semaphore, #tpu.memory_space<semaphore_mem>> -> memref<!tpu.dma_semaphore, #tpu.memory_space<semaphore_mem>>
    tpu.enqueue_dma source(%62 : memref<8x128xf32, #tpu.memory_space<any>>) target(%64 : memref<8x128xf32, #tpu.memory_space<vmem>>) target_semaphore(%66 : memref<!tpu.dma_semaphore, #tpu.memory_space<semaphore_mem>>)
    %c1_i32_26 = arith.constant 1 : i32
    %67 = arith.cmpi sge, %arg0, %c1_i32_26 : i32
    %68 = arith.extui %67 : i1 to i32
    %c0_i32_27 = arith.constant 0 : i32
    %69 = arith.cmpi ne, %68, %c0_i32_27 : i32
    scf.if %69 {
      %c0_i32_33 = arith.constant 0 : i32
      %c0_i32_34 = arith.constant 0 : i32
      %c0_i32_35 = arith.constant 0 : i32
      %78 = tpu.memref_slice %arg3[%c0_i32_33, %c0_i32_34, %c0_i32_35] : memref<4x32x128xf32, #tpu.memory_space<any>> -> memref<1x8x128xf32, #tpu.memory_space<any>>
      %79 = tpu.memref_squeeze %78 : memref<1x8x128xf32, #tpu.memory_space<any>> -> memref<8x128xf32, #tpu.memory_space<any>>
      %c0_i32_36 = arith.constant 0 : i32
      %c0_i32_37 = arith.constant 0 : i32
      %80 = tpu.memref_slice %arg5[%10, %c0_i32_36, %c0_i32_37] : memref<2x32x128xf32, #tpu.memory_space<vmem>> -> memref<1x8x128xf32, #tpu.memory_space<vmem>>
      %81 = tpu.memref_squeeze %80 : memref<1x8x128xf32, #tpu.memory_space<vmem>> -> memref<8x128xf32, #tpu.memory_space<vmem>>
      %82 = tpu.memref_slice %arg6[%10] : memref<2x!tpu.dma_semaphore, #tpu.memory_space<semaphore_mem>> -> memref<1x!tpu.dma_semaphore, #tpu.memory_space<semaphore_mem>>
      %83 = tpu.memref_squeeze %82 : memref<1x!tpu.dma_semaphore, #tpu.memory_space<semaphore_mem>> -> memref<!tpu.dma_semaphore, #tpu.memory_space<semaphore_mem>>
      tpu.wait_dma2 semaphore(%83 : memref<!tpu.dma_semaphore, #tpu.memory_space<semaphore_mem>>) src(%79 : memref<8x128xf32, #tpu.memory_space<any>>) dst(%81 : memref<8x128xf32, #tpu.memory_space<vmem>>)
      %c0_i32_38 = arith.constant 0 : i32
      %c0_i32_39 = arith.constant 0 : i32
      %c0_i32_40 = arith.constant 0 : i32
      %84 = tpu.memref_slice %arg3[%c0_i32_38, %c0_i32_39, %c0_i32_40] : memref<4x32x128xf32, #tpu.memory_space<any>> -> memref<1x8x128xf32, #tpu.memory_space<any>>
      %85 = tpu.memref_squeeze %84 : memref<1x8x128xf32, #tpu.memory_space<any>> -> memref<8x128xf32, #tpu.memory_space<any>>
      %c0_i32_41 = arith.constant 0 : i32
      %c0_i32_42 = arith.constant 0 : i32
      %86 = tpu.memref_slice %arg5[%10, %c0_i32_41, %c0_i32_42] : memref<2x32x128xf32, #tpu.memory_space<vmem>> -> memref<1x8x128xf32, #tpu.memory_space<vmem>>
      %87 = tpu.memref_squeeze %86 : memref<1x8x128xf32, #tpu.memory_space<vmem>> -> memref<8x128xf32, #tpu.memory_space<vmem>>
      %88 = tpu.memref_slice %arg6[%10] : memref<2x!tpu.dma_semaphore, #tpu.memory_space<semaphore_mem>> -> memref<1x!tpu.dma_semaphore, #tpu.memory_space<semaphore_mem>>
      %89 = tpu.memref_squeeze %88 : memref<1x!tpu.dma_semaphore, #tpu.memory_space<semaphore_mem>> -> memref<!tpu.dma_semaphore, #tpu.memory_space<semaphore_mem>>
      tpu.wait_dma2 semaphore(%89 : memref<!tpu.dma_semaphore, #tpu.memory_space<semaphore_mem>>) src(%85 : memref<8x128xf32, #tpu.memory_space<any>>) dst(%87 : memref<8x128xf32, #tpu.memory_space<vmem>>)
      %c0_i32_43 = arith.constant 0 : i32
      %c0_i32_44 = arith.constant 0 : i32
      %c0_i32_45 = arith.constant 0 : i32
      %90 = tpu.memref_slice %arg3[%c0_i32_43, %c0_i32_44, %c0_i32_45] : memref<4x32x128xf32, #tpu.memory_space<any>> -> memref<1x8x128xf32, #tpu.memory_space<any>>
      %91 = tpu.memref_squeeze %90 : memref<1x8x128xf32, #tpu.memory_space<any>> -> memref<8x128xf32, #tpu.memory_space<any>>
      %c0_i32_46 = arith.constant 0 : i32
      %c0_i32_47 = arith.constant 0 : i32
      %92 = tpu.memref_slice %arg5[%10, %c0_i32_46, %c0_i32_47] : memref<2x32x128xf32, #tpu.memory_space<vmem>> -> memref<1x8x128xf32, #tpu.memory_space<vmem>>
      %93 = tpu.memref_squeeze %92 : memref<1x8x128xf32, #tpu.memory_space<vmem>> -> memref<8x128xf32, #tpu.memory_space<vmem>>
      %94 = tpu.memref_slice %arg6[%10] : memref<2x!tpu.dma_semaphore, #tpu.memory_space<semaphore_mem>> -> memref<1x!tpu.dma_semaphore, #tpu.memory_space<semaphore_mem>>
      %95 = tpu.memref_squeeze %94 : memref<1x!tpu.dma_semaphore, #tpu.memory_space<semaphore_mem>> -> memref<!tpu.dma_semaphore, #tpu.memory_space<semaphore_mem>>
      tpu.wait_dma2 semaphore(%95 : memref<!tpu.dma_semaphore, #tpu.memory_space<semaphore_mem>>) src(%91 : memref<8x128xf32, #tpu.memory_space<any>>) dst(%93 : memref<8x128xf32, #tpu.memory_space<vmem>>)
      %c0_i32_48 = arith.constant 0 : i32
      %c0_i32_49 = arith.constant 0 : i32
      %c0_i32_50 = arith.constant 0 : i32
      %96 = tpu.memref_slice %arg3[%c0_i32_48, %c0_i32_49, %c0_i32_50] : memref<4x32x128xf32, #tpu.memory_space<any>> -> memref<1x8x128xf32, #tpu.memory_space<any>>
      %97 = tpu.memref_squeeze %96 : memref<1x8x128xf32, #tpu.memory_space<any>> -> memref<8x128xf32, #tpu.memory_space<any>>
      %c0_i32_51 = arith.constant 0 : i32
      %c0_i32_52 = arith.constant 0 : i32
      %98 = tpu.memref_slice %arg5[%10, %c0_i32_51, %c0_i32_52] : memref<2x32x128xf32, #tpu.memory_space<vmem>> -> memref<1x8x128xf32, #tpu.memory_space<vmem>>
      %99 = tpu.memref_squeeze %98 : memref<1x8x128xf32, #tpu.memory_space<vmem>> -> memref<8x128xf32, #tpu.memory_space<vmem>>
      %100 = tpu.memref_slice %arg6[%10] : memref<2x!tpu.dma_semaphore, #tpu.memory_space<semaphore_mem>> -> memref<1x!tpu.dma_semaphore, #tpu.memory_space<semaphore_mem>>
      %101 = tpu.memref_squeeze %100 : memref<1x!tpu.dma_semaphore, #tpu.memory_space<semaphore_mem>> -> memref<!tpu.dma_semaphore, #tpu.memory_space<semaphore_mem>>
      tpu.wait_dma2 semaphore(%101 : memref<!tpu.dma_semaphore, #tpu.memory_space<semaphore_mem>>) src(%97 : memref<8x128xf32, #tpu.memory_space<any>>) dst(%99 : memref<8x128xf32, #tpu.memory_space<vmem>>)
      %c1_i32_53 = arith.constant 1 : i32
      %102 = arith.subi %arg0, %c1_i32_53 : i32
      %c32_i32 = arith.constant 32 : i32
      %103 = arith.muli %102, %c32_i32 : i32
      %c0_i32_54 = arith.constant 0 : i32
      %c0_i32_55 = arith.constant 0 : i32
      %104 = tpu.memref_slice %arg5[%10, %c0_i32_54, %c0_i32_55] : memref<2x32x128xf32, #tpu.memory_space<vmem>> -> memref<1x32x128xf32, #tpu.memory_space<vmem>>
      %105 = tpu.memref_squeeze %104 : memref<1x32x128xf32, #tpu.memory_space<vmem>> -> memref<32x128xf32, #tpu.memory_space<vmem>>
      %c0_i32_56 = arith.constant 0 : i32
      %106 = tpu.memref_slice %arg4[%103, %c0_i32_56] : memref<96x128xf32, #tpu.memory_space<any>> -> memref<32x128xf32, #tpu.memory_space<any>>
      %107 = tpu.memref_slice %arg7[%10] : memref<2x!tpu.dma_semaphore, #tpu.memory_space<semaphore_mem>> -> memref<1x!tpu.dma_semaphore, #tpu.memory_space<semaphore_mem>>
      %108 = tpu.memref_squeeze %107 : memref<1x!tpu.dma_semaphore, #tpu.memory_space<semaphore_mem>> -> memref<!tpu.dma_semaphore, #tpu.memory_space<semaphore_mem>>
      tpu.enqueue_dma source(%105 : memref<32x128xf32, #tpu.memory_space<vmem>>) target(%106 : memref<32x128xf32, #tpu.memory_space<any>>) target_semaphore(%108 : memref<!tpu.dma_semaphore, #tpu.memory_space<semaphore_mem>>)
    } else {
    }
    %c2_i32_28 = arith.constant 2 : i32
    %70 = arith.cmpi eq, %arg0, %c2_i32_28 : i32
    %71 = arith.extui %70 : i1 to i32
    %c0_i32_29 = arith.constant 0 : i32
    %72 = arith.cmpi ne, %71, %c0_i32_29 : i32
    scf.if %72 {
      %c0_i32_33 = arith.constant 0 : i32
      %c0_i32_34 = arith.constant 0 : i32
      %c0_i32_35 = arith.constant 0 : i32
      %78 = tpu.memref_slice %arg3[%c0_i32_33, %c0_i32_34, %c0_i32_35] : memref<4x32x128xf32, #tpu.memory_space<any>> -> memref<1x8x128xf32, #tpu.memory_space<any>>
      %79 = tpu.memref_squeeze %78 : memref<1x8x128xf32, #tpu.memory_space<any>> -> memref<8x128xf32, #tpu.memory_space<any>>
      %c0_i32_36 = arith.constant 0 : i32
      %c0_i32_37 = arith.constant 0 : i32
      %80 = tpu.memref_slice %arg5[%9, %c0_i32_36, %c0_i32_37] : memref<2x32x128xf32, #tpu.memory_space<vmem>> -> memref<1x8x128xf32, #tpu.memory_space<vmem>>
      %81 = tpu.memref_squeeze %80 : memref<1x8x128xf32, #tpu.memory_space<vmem>> -> memref<8x128xf32, #tpu.memory_space<vmem>>
      %82 = tpu.memref_slice %arg6[%9] : memref<2x!tpu.dma_semaphore, #tpu.memory_space<semaphore_mem>> -> memref<1x!tpu.dma_semaphore, #tpu.memory_space<semaphore_mem>>
      %83 = tpu.memref_squeeze %82 : memref<1x!tpu.dma_semaphore, #tpu.memory_space<semaphore_mem>> -> memref<!tpu.dma_semaphore, #tpu.memory_space<semaphore_mem>>
      tpu.wait_dma2 semaphore(%83 : memref<!tpu.dma_semaphore, #tpu.memory_space<semaphore_mem>>) src(%79 : memref<8x128xf32, #tpu.memory_space<any>>) dst(%81 : memref<8x128xf32, #tpu.memory_space<vmem>>)
      %c0_i32_38 = arith.constant 0 : i32
      %c0_i32_39 = arith.constant 0 : i32
      %c0_i32_40 = arith.constant 0 : i32
      %84 = tpu.memref_slice %arg3[%c0_i32_38, %c0_i32_39, %c0_i32_40] : memref<4x32x128xf32, #tpu.memory_space<any>> -> memref<1x8x128xf32, #tpu.memory_space<any>>
      %85 = tpu.memref_squeeze %84 : memref<1x8x128xf32, #tpu.memory_space<any>> -> memref<8x128xf32, #tpu.memory_space<any>>
      %c0_i32_41 = arith.constant 0 : i32
      %c0_i32_42 = arith.constant 0 : i32
      %86 = tpu.memref_slice %arg5[%9, %c0_i32_41, %c0_i32_42] : memref<2x32x128xf32, #tpu.memory_space<vmem>> -> memref<1x8x128xf32, #tpu.memory_space<vmem>>
      %87 = tpu.memref_squeeze %86 : memref<1x8x128xf32, #tpu.memory_space<vmem>> -> memref<8x128xf32, #tpu.memory_space<vmem>>
      %88 = tpu.memref_slice %arg6[%9] : memref<2x!tpu.dma_semaphore, #tpu.memory_space<semaphore_mem>> -> memref<1x!tpu.dma_semaphore, #tpu.memory_space<semaphore_mem>>
      %89 = tpu.memref_squeeze %88 : memref<1x!tpu.dma_semaphore, #tpu.memory_space<semaphore_mem>> -> memref<!tpu.dma_semaphore, #tpu.memory_space<semaphore_mem>>
      tpu.wait_dma2 semaphore(%89 : memref<!tpu.dma_semaphore, #tpu.memory_space<semaphore_mem>>) src(%85 : memref<8x128xf32, #tpu.memory_space<any>>) dst(%87 : memref<8x128xf32, #tpu.memory_space<vmem>>)
      %c0_i32_43 = arith.constant 0 : i32
      %c0_i32_44 = arith.constant 0 : i32
      %c0_i32_45 = arith.constant 0 : i32
      %90 = tpu.memref_slice %arg3[%c0_i32_43, %c0_i32_44, %c0_i32_45] : memref<4x32x128xf32, #tpu.memory_space<any>> -> memref<1x8x128xf32, #tpu.memory_space<any>>
      %91 = tpu.memref_squeeze %90 : memref<1x8x128xf32, #tpu.memory_space<any>> -> memref<8x128xf32, #tpu.memory_space<any>>
      %c0_i32_46 = arith.constant 0 : i32
      %c0_i32_47 = arith.constant 0 : i32
      %92 = tpu.memref_slice %arg5[%9, %c0_i32_46, %c0_i32_47] : memref<2x32x128xf32, #tpu.memory_space<vmem>> -> memref<1x8x128xf32, #tpu.memory_space<vmem>>
      %93 = tpu.memref_squeeze %92 : memref<1x8x128xf32, #tpu.memory_space<vmem>> -> memref<8x128xf32, #tpu.memory_space<vmem>>
      %94 = tpu.memref_slice %arg6[%9] : memref<2x!tpu.dma_semaphore, #tpu.memory_space<semaphore_mem>> -> memref<1x!tpu.dma_semaphore, #tpu.memory_space<semaphore_mem>>
      %95 = tpu.memref_squeeze %94 : memref<1x!tpu.dma_semaphore, #tpu.memory_space<semaphore_mem>> -> memref<!tpu.dma_semaphore, #tpu.memory_space<semaphore_mem>>
      tpu.wait_dma2 semaphore(%95 : memref<!tpu.dma_semaphore, #tpu.memory_space<semaphore_mem>>) src(%91 : memref<8x128xf32, #tpu.memory_space<any>>) dst(%93 : memref<8x128xf32, #tpu.memory_space<vmem>>)
      %c0_i32_48 = arith.constant 0 : i32
      %c0_i32_49 = arith.constant 0 : i32
      %c0_i32_50 = arith.constant 0 : i32
      %96 = tpu.memref_slice %arg3[%c0_i32_48, %c0_i32_49, %c0_i32_50] : memref<4x32x128xf32, #tpu.memory_space<any>> -> memref<1x8x128xf32, #tpu.memory_space<any>>
      %97 = tpu.memref_squeeze %96 : memref<1x8x128xf32, #tpu.memory_space<any>> -> memref<8x128xf32, #tpu.memory_space<any>>
      %c0_i32_51 = arith.constant 0 : i32
      %c0_i32_52 = arith.constant 0 : i32
      %98 = tpu.memref_slice %arg5[%9, %c0_i32_51, %c0_i32_52] : memref<2x32x128xf32, #tpu.memory_space<vmem>> -> memref<1x8x128xf32, #tpu.memory_space<vmem>>
      %99 = tpu.memref_squeeze %98 : memref<1x8x128xf32, #tpu.memory_space<vmem>> -> memref<8x128xf32, #tpu.memory_space<vmem>>
      %100 = tpu.memref_slice %arg6[%9] : memref<2x!tpu.dma_semaphore, #tpu.memory_space<semaphore_mem>> -> memref<1x!tpu.dma_semaphore, #tpu.memory_space<semaphore_mem>>
      %101 = tpu.memref_squeeze %100 : memref<1x!tpu.dma_semaphore, #tpu.memory_space<semaphore_mem>> -> memref<!tpu.dma_semaphore, #tpu.memory_space<semaphore_mem>>
      tpu.wait_dma2 semaphore(%101 : memref<!tpu.dma_semaphore, #tpu.memory_space<semaphore_mem>>) src(%97 : memref<8x128xf32, #tpu.memory_space<any>>) dst(%99 : memref<8x128xf32, #tpu.memory_space<vmem>>)
      %c32_i32 = arith.constant 32 : i32
      %102 = arith.muli %arg0, %c32_i32 : i32
      %c0_i32_53 = arith.constant 0 : i32
      %c0_i32_54 = arith.constant 0 : i32
      %103 = tpu.memref_slice %arg5[%9, %c0_i32_53, %c0_i32_54] : memref<2x32x128xf32, #tpu.memory_space<vmem>> -> memref<1x32x128xf32, #tpu.memory_space<vmem>>
      %104 = tpu.memref_squeeze %103 : memref<1x32x128xf32, #tpu.memory_space<vmem>> -> memref<32x128xf32, #tpu.memory_space<vmem>>
      %c0_i32_55 = arith.constant 0 : i32
      %105 = tpu.memref_slice %arg4[%102, %c0_i32_55] : memref<96x128xf32, #tpu.memory_space<any>> -> memref<32x128xf32, #tpu.memory_space<any>>
      %106 = tpu.memref_slice %arg7[%9] : memref<2x!tpu.dma_semaphore, #tpu.memory_space<semaphore_mem>> -> memref<1x!tpu.dma_semaphore, #tpu.memory_space<semaphore_mem>>
      %107 = tpu.memref_squeeze %106 : memref<1x!tpu.dma_semaphore, #tpu.memory_space<semaphore_mem>> -> memref<!tpu.dma_semaphore, #tpu.memory_space<semaphore_mem>>
      tpu.enqueue_dma source(%104 : memref<32x128xf32, #tpu.memory_space<vmem>>) target(%105 : memref<32x128xf32, #tpu.memory_space<any>>) target_semaphore(%107 : memref<!tpu.dma_semaphore, #tpu.memory_space<semaphore_mem>>)
      %c32_i32_56 = arith.constant 32 : i32
      %108 = arith.muli %arg0, %c32_i32_56 : i32
      %c0_i32_57 = arith.constant 0 : i32
      %c0_i32_58 = arith.constant 0 : i32
      %109 = tpu.memref_slice %arg5[%9, %c0_i32_57, %c0_i32_58] : memref<2x32x128xf32, #tpu.memory_space<vmem>> -> memref<1x32x128xf32, #tpu.memory_space<vmem>>
      %110 = tpu.memref_squeeze %109 : memref<1x32x128xf32, #tpu.memory_space<vmem>> -> memref<32x128xf32, #tpu.memory_space<vmem>>
      %c0_i32_59 = arith.constant 0 : i32
      %111 = tpu.memref_slice %arg4[%108, %c0_i32_59] : memref<96x128xf32, #tpu.memory_space<any>> -> memref<32x128xf32, #tpu.memory_space<any>>
      %112 = tpu.memref_slice %arg7[%9] : memref<2x!tpu.dma_semaphore, #tpu.memory_space<semaphore_mem>> -> memref<1x!tpu.dma_semaphore, #tpu.memory_space<semaphore_mem>>
      %113 = tpu.memref_squeeze %112 : memref<1x!tpu.dma_semaphore, #tpu.memory_space<semaphore_mem>> -> memref<!tpu.dma_semaphore, #tpu.memory_space<semaphore_mem>>
      tpu.wait_dma2 semaphore(%113 : memref<!tpu.dma_semaphore, #tpu.memory_space<semaphore_mem>>) src(%110 : memref<32x128xf32, #tpu.memory_space<vmem>>) dst(%111 : memref<32x128xf32, #tpu.memory_space<any>>)
    } else {
    }
    %c2_i32_30 = arith.constant 2 : i32
    %73 = arith.cmpi eq, %arg0, %c2_i32_30 : i32
    %c1_i32_31 = arith.constant 1 : i32
    %74 = arith.cmpi sge, %arg0, %c1_i32_31 : i32
    %75 = arith.andi %73, %74 : i1
    %76 = arith.extui %75 : i1 to i32
    %c0_i32_32 = arith.constant 0 : i32
    %77 = arith.cmpi ne, %76, %c0_i32_32 : i32
    scf.if %77 {
      %c1_i32_33 = arith.constant 1 : i32
      %78 = arith.subi %arg0, %c1_i32_33 : i32
      %c32_i32 = arith.constant 32 : i32
      %79 = arith.muli %78, %c32_i32 : i32
      %c0_i32_34 = arith.constant 0 : i32
      %c0_i32_35 = arith.constant 0 : i32
      %80 = tpu.memref_slice %arg5[%10, %c0_i32_34, %c0_i32_35] : memref<2x32x128xf32, #tpu.memory_space<vmem>> -> memref<1x32x128xf32, #tpu.memory_space<vmem>>
      %81 = tpu.memref_squeeze %80 : memref<1x32x128xf32, #tpu.memory_space<vmem>> -> memref<32x128xf32, #tpu.memory_space<vmem>>
      %c0_i32_36 = arith.constant 0 : i32
      %82 = tpu.memref_slice %arg4[%79, %c0_i32_36] : memref<96x128xf32, #tpu.memory_space<any>> -> memref<32x128xf32, #tpu.memory_space<any>>
      %83 = tpu.memref_slice %arg7[%10] : memref<2x!tpu.dma_semaphore, #tpu.memory_space<semaphore_mem>> -> memref<1x!tpu.dma_semaphore, #tpu.memory_space<semaphore_mem>>
      %84 = tpu.memref_squeeze %83 : memref<1x!tpu.dma_semaphore, #tpu.memory_space<semaphore_mem>> -> memref<!tpu.dma_semaphore, #tpu.memory_space<semaphore_mem>>
      tpu.wait_dma2 semaphore(%84 : memref<!tpu.dma_semaphore, #tpu.memory_space<semaphore_mem>>) src(%81 : memref<32x128xf32, #tpu.memory_space<vmem>>) dst(%82 : memref<32x128xf32, #tpu.memory_space<any>>)
    } else {
    }
    return
  }
}

</mosaic_0001>

<llo_original>
// kernel: tpu_custom_call.1
$region0: #{tpu_custom_call.1}
  #allocation0 [shape = 'u32[]', space=smem, size = 0x4, offset = 0x4, fixed_abs, tag = 'smem constant byte address 0x4 - core index']
  #allocation1 [shape = 'u32[144,128]{1,0:T(1,128)}', space=vmem, size = 0x12000, scoped, tag = 'internal scratch']
  #allocation2 [shape = 'f32[2,32,128]{2,1,0:T(8,128)}', space=vmem, size = 0x8000, scoped, tag = 'scratch operand']
  #allocation3 [shape = 's32[2]{0}', space=sflag, size = 0x8, scoped, tag = 'scratch operand']
  #allocation4 [shape = 's32[2]{0}', space=sflag, size = 0x8, scoped, tag = 'scratch operand']
  #allocation5 [shape = 's32[1]{0}', space=sflag, size = 0x4, scoped, tag = 'scoped memory for tpu_custom_call.1']
  #allocation6 [shape = 'u8[512]{0}', space=smem, size = 0x200, scoped, tag = 'prefetched SMEM operand 0']
  #allocation7 [shape = 'u8[512]{0}', space=smem, size = 0x200, scoped, tag = 'prefetched SMEM operand 1']
  #allocation8 [shape = 's32[]', space=sflag, size = 0x4, offset = 0, fixed_abs, tag = 'sflag constant byte address 0x0 - dummy sync flag']
  #allocation9 [shape = 's32[]', space=sflag, size = 0x4, offset = 0, fixed_abs, tag = 'sflag constant byte address 0x0 - dummy sync flag']
  #allocation10 [shape = 'u32[]', space=smem, size = 0x4, offset = 0x44, fixed_abs, tag = 'smem constant byte address 0x44 - assertion arg 0']
  #allocation11 [shape = 'u32[]', space=smem, size = 0x4, offset = 0x48, fixed_abs, tag = 'smem constant byte address 0x48 - assertion arg 1']
  #allocation12 [shape = 's32[]', space=sflag, size = 0x4, offset = 0, fixed_abs, tag = 'sflag constant byte address 0x0 - dummy sync flag']
  #allocation13 [shape = 's32[]', space=sflag, size = 0x4, offset = 0, fixed_abs, tag = 'sflag constant byte address 0x0 - dummy sync flag']
  #allocation14 [shape = 's32[]', space=sflag, size = 0x4, offset = 0, fixed_abs, tag = 'sflag constant byte address 0x0 - dummy sync flag']
  #allocation15 [shape = 's32[]', space=sflag, size = 0x4, offset = 0, fixed_abs, tag = 'sflag constant byte address 0x0 - dummy sync flag']
  #allocation16 [shape = 's32[]', space=sflag, size = 0x4, offset = 0, fixed_abs, tag = 'sflag constant byte address 0x0 - dummy sync flag']
  #allocation17 [shape = 's32[]', space=sflag, size = 0x4, offset = 0, fixed_abs, tag = 'sflag constant byte address 0x0 - dummy sync flag']
  #allocation18 [shape = 's32[]', space=sflag, size = 0x4, offset = 0, fixed_abs, tag = 'sflag constant byte address 0x0 - dummy sync flag']
  #allocation19 [shape = 's32[]', space=sflag, size = 0x4, offset = 0, fixed_abs, tag = 'sflag constant byte address 0x0 - dummy sync flag']
  #allocation20 [shape = 's32[]', space=sflag, size = 0x4, offset = 0, fixed_abs, tag = 'sflag constant byte address 0x0 - dummy sync flag']
  #allocation21 [shape = 's32[]', space=sflag, size = 0x4, offset = 0, fixed_abs, tag = 'sflag constant byte address 0x0 - dummy sync flag']
  %s0 = inlined_call_operand.hbm [shape: s32[12], index: 0, kind: input, shape index: {}]
  %s1 = inlined_call_operand.vmem [shape: s32[12], index: 1, kind: input, shape index: {}]
  %s2 = inlined_call_operand.hbm [shape: f32[4,32,128], index: 2, kind: input, shape index: {}]
  %s3 = inlined_call_operand.hbm [shape: f32[96,128], index: 3, kind: output, shape index: {}]
  %s4 = sld [smem:[#allocation0]]
  $region49: #{tpu_custom_call.1} parent=0
    _
  %s6 = ssub.s32 1, %s4
  %s7 = scalar_select 0, %s6, %s4
  %9 = dma.hbm_to_smem %s0, 16, [#allocation6], [#allocation5]
  %s10 = sshll.u32 %s1, 4
  %s11 = int_to_ptr.vmem [resolvable:$true] %s10
  %13 = dma.vmem_to_smem %s11, 16, [#allocation7], [#allocation5]
  %14 = dma.done [#allocation5], 32
  %15 = sfence
  loop: start=0, step=1, limit=3
  $region2: #{tpu_custom_call.1} parent=0 // loop_pre_header
    _
  $region3: #{tpu_custom_call.1} parent=0 // loop_header
    %s17 = sphi 0, %s21
    %p18 = scmp.ge.s32.totalorder %s17, 3
  $region4: #{tpu_custom_call.1} parent=0 // loop_header_branch
    %20 = sbr.rel (%p18) target = $region8
  $region5: #{tpu_custom_call.1} parent=0 // loop_body
    %s22 = sadd.s32 %s17, 1
    %p23 = scmp.lt.s32.totalorder %s17, 0
    %s24 = ssub.s32 0, %s17
    %s25 = scalar_select %p23, %s24, %s17
    %s26 = sand.u32 %s25, 1
    %s27 = ssub.s32 0, %s26
    %s28 = scalar_select %p23, %s27, %s26
    %p29 = scmp.ne.s32.totalorder %s28, 0
    %p30 = scmp.lt.s32.totalorder %s28, 0
    %p31 = pnand %p30, %p29
    %p32 = pneg %p31
    %s33 = sadd.s32 %s28, 2
    %s34 = scalar_select %p32, %s33, %s28
    %s35 = ssub.s32 1, %s34
    %s36 = smul.u32 %s17, 4
    %p37 = scmp.ge.s32.totalorder %s17, 2
    // Predicated region
    $region9: #{tpu_custom_call.1} parent=5 // pred_check
      %p38 = pneg %p37
    $region10: #{tpu_custom_call.1} parent=5 // pred_check_branch
      %40 = sbr.rel (%p38) target = $region12
    $region11: #{tpu_custom_call.1} parent=5 // pred_region
      %s41 = scalar_lea.sflag [#allocation4], %s34
      %s42 = smul.u32 32, 1
      %s43 = sshll.u32 %s42, 4
      %44 = dma.done %s41, %s43
    $region12: #{tpu_custom_call.1} parent=5 // pred_fallthru
      _
    %s45 = sld [smem:[#allocation6 + %s36]]
    %s46 = sld [smem:[#allocation7 + %s36]]
    %s47 = ssub.s32 %s46, 8
    %s48 = smul.u32 %s45, 32
    %s49 = sadd.s32 %s47, %s48
    %s50 = smul.addr %s49, 16
    %s51 = scalar_lea.hbm %s2, %s50
    %s52 = smul.u32 %s34, 32
    %s53 = scalar_lea.vmem [#allocation2], %s52
    %s54 = scalar_lea.sflag [#allocation3], %s34
    // Predicated region
    $region13: #{tpu_custom_call.1} parent=5 // pred_check
      _
    $region14: #{tpu_custom_call.1} parent=5 // pred_check_branch
      %56 = sbr.rel target = $region16
    $region15: #{tpu_custom_call.1} parent=5 // pred_region
      %57 = sst [smem:[#allocation10]] [#allocation9]
      %58 = sst [smem:[#allocation11]] [#allocation8]
    $region16: #{tpu_custom_call.1} parent=5 // pred_fallthru
      _
    %60 = shalt.err (0)
    %s62 = sshll.u32 %s53, 4
    %s63 = int_to_ptr.vmem [resolvable:$true] %s62
    %65 = dma.hbm_to_vmem [thread:$0]  %s51, 128, %s63, %s54
    %s66 = sadd.s32 %s36, 1
    %s67 = sld [smem:[#allocation6 + %s66]]
    %s68 = sld [smem:[#allocation7 + %s66]]
    %s69 = ssub.s32 %s68, 8
    %s70 = smul.u32 %s67, 32
    %s71 = sadd.s32 %s69, %s70
    %s72 = smul.addr %s71, 16
    %s73 = scalar_lea.hbm %s2, %s72
    %s74 = sadd.s32 8, %s52
    %s75 = scalar_lea.vmem [#allocation2], %s74
    // Predicated region
    $region17: #{tpu_custom_call.1} parent=5 // pred_check
      _
    $region18: #{tpu_custom_call.1} parent=5 // pred_check_branch
      %77 = sbr.rel target = $region20
    $region19: #{tpu_custom_call.1} parent=5 // pred_region
      %78 = sst [smem:[#allocation10]] [#allocation13]
      %79 = sst [smem:[#allocation11]] [#allocation12]
    $region20: #{tpu_custom_call.1} parent=5 // pred_fallthru
      _
    %81 = shalt.err (0)
    %s83 = sshll.u32 %s75, 4
    %s84 = int_to_ptr.vmem [resolvable:$true] %s83
    %86 = dma.hbm_to_vmem [thread:$0]  %s73, 128, %s84, %s54
    %s87 = sadd.s32 %s36, 2
    %s88 = sld [smem:[#allocation6 + %s87]]
    %s89 = sld [smem:[#allocation7 + %s87]]
    %s90 = ssub.s32 %s89, 8
    %s91 = smul.u32 %s88, 32
    %s92 = sadd.s32 %s90, %s91
    %s93 = smul.addr %s92, 16
    %s94 = scalar_lea.hbm %s2, %s93
    %s95 = sadd.s32 16, %s52
    %s96 = scalar_lea.vmem [#allocation2], %s95
    // Predicated region
    $region21: #{tpu_custom_call.1} parent=5 // pred_check
      _
    $region22: #{tpu_custom_call.1} parent=5 // pred_check_branch
      %98 = sbr.rel target = $region24
    $region23: #{tpu_custom_call.1} parent=5 // pred_region
      %99 = sst [smem:[#allocation10]] [#allocation15]
      %100 = sst [smem:[#allocation11]] [#allocation14]
    $region24: #{tpu_custom_call.1} parent=5 // pred_fallthru
      _
    %102 = shalt.err (0)
    %s104 = sshll.u32 %s96, 4
    %s105 = int_to_ptr.vmem [resolvable:$true] %s104
    %107 = dma.hbm_to_vmem [thread:$0]  %s94, 128, %s105, %s54
    %s108 = sadd.s32 %s36, 3
    %s109 = sld [smem:[#allocation6 + %s108]]
    %s110 = sld [smem:[#allocation7 + %s108]]
    %s111 = ssub.s32 %s110, 8
    %s112 = smul.u32 %s109, 32
    %s113 = sadd.s32 %s111, %s112
    %s114 = smul.addr %s113, 16
    %s115 = scalar_lea.hbm %s2, %s114
    %s116 = sadd.s32 24, %s52
    %s117 = scalar_lea.vmem [#allocation2], %s116
    // Predicated region
    $region25: #{tpu_custom_call.1} parent=5 // pred_check
      _
    $region26: #{tpu_custom_call.1} parent=5 // pred_check_branch
      %119 = sbr.rel target = $region28
    $region27: #{tpu_custom_call.1} parent=5 // pred_region
      %120 = sst [smem:[#allocation10]] [#allocation17]
      %121 = sst [smem:[#allocation11]] [#allocation16]
    $region28: #{tpu_custom_call.1} parent=5 // pred_fallthru
      _
    %123 = shalt.err (0)
    %s125 = sshll.u32 %s117, 4
    %s126 = int_to_ptr.vmem [resolvable:$true] %s125
    %128 = dma.hbm_to_vmem [thread:$0]  %s115, 128, %s126, %s54
    %p129 = scmp.ge.s32.totalorder %s17, 1
    // Predicated region
    $region29: #{tpu_custom_call.1} parent=5 // pred_check
      %p130 = pneg %p129
    $region30: #{tpu_custom_call.1} parent=5 // pred_check_branch
      %132 = sbr.rel (%p130) target = $region32
    $region31: #{tpu_custom_call.1} parent=5 // pred_region
      %s133 = scalar_lea.sflag [#allocation3], %s35
      %s134 = smul.u32 8, 1
      %s135 = sshll.u32 %s134, 4
      %136 = dma.done %s133, %s135
      %s137 = sshll.u32 %s134, 4
      %138 = dma.done %s133, %s137
      %s139 = sshll.u32 %s134, 4
      %140 = dma.done %s133, %s139
      %s141 = sshll.u32 %s134, 4
      %142 = dma.done %s133, %s141
      %s143 = ssub.s32 %s17, 1
      %s144 = smul.u32 %s143, 32
      %s145 = smul.u32 %s35, 32
      %s146 = scalar_lea.vmem [#allocation2], %s145
      %s147 = smul.addr %s144, 16
      %s148 = scalar_lea.hbm %s3, %s147
      %s149 = scalar_lea.sflag [#allocation4], %s35
      // Predicated region
      $region33: #{tpu_custom_call.1} parent=31 // pred_check
        _
      $region34: #{tpu_custom_call.1} parent=31 // pred_check_branch
        %151 = sbr.rel target = $region36
      $region35: #{tpu_custom_call.1} parent=31 // pred_region
        %152 = sst [smem:[#allocation10]] [#allocation19]
        %153 = sst [smem:[#allocation11]] [#allocation18]
      $region36: #{tpu_custom_call.1} parent=31 // pred_fallthru
        _
      %155 = shalt.err (0)
      %s157 = sshll.u32 %s146, 4
      %s158 = int_to_ptr.vmem [resolvable:$true] %s157
      %160 = dma.vmem_to_hbm [thread:$0]  %s158, 512, %s148, %s149
    $region32: #{tpu_custom_call.1} parent=5 // pred_fallthru
      _
    %p161 = scmp.eq.s32.totalorder %s17, 2
    // Predicated region
    $region37: #{tpu_custom_call.1} parent=5 // pred_check
      %p162 = pneg %p161
    $region38: #{tpu_custom_call.1} parent=5 // pred_check_branch
      %164 = sbr.rel (%p162) target = $region40
    $region39: #{tpu_custom_call.1} parent=5 // pred_region
      %s165 = smul.u32 8, 1
      %s166 = sshll.u32 %s165, 4
      %167 = dma.done %s54, %s166
      %s168 = sshll.u32 %s165, 4
      %169 = dma.done %s54, %s168
      %s170 = sshll.u32 %s165, 4
      %171 = dma.done %s54, %s170
      %s172 = sshll.u32 %s165, 4
      %173 = dma.done %s54, %s172
      %s174 = smul.u32 %s17, 32
      %s175 = smul.addr %s174, 16
      %s176 = scalar_lea.hbm %s3, %s175
      %s177 = scalar_lea.sflag [#allocation4], %s34
      // Predicated region
      $region41: #{tpu_custom_call.1} parent=39 // pred_check
        _
      $region42: #{tpu_custom_call.1} parent=39 // pred_check_branch
        %179 = sbr.rel target = $region44
      $region43: #{tpu_custom_call.1} parent=39 // pred_region
        %180 = sst [smem:[#allocation10]] [#allocation21]
        %181 = sst [smem:[#allocation11]] [#allocation20]
      $region44: #{tpu_custom_call.1} parent=39 // pred_fallthru
        _
      %183 = shalt.err (0)
      %s185 = sshll.u32 %s53, 4
      %s186 = int_to_ptr.vmem [resolvable:$true] %s185
      %188 = dma.vmem_to_hbm [thread:$0]  %s186, 512, %s176, %s177
      %s189 = smul.u32 32, 1
      %s190 = sshll.u32 %s189, 4
      %191 = dma.done %s177, %s190
    $region40: #{tpu_custom_call.1} parent=5 // pred_fallthru
      _
    %p192 = pnand %p161, %p129
    %p193 = pneg %p192
    // Predicated region
    $region45: #{tpu_custom_call.1} parent=5 // pred_check
      _
    $region46: #{tpu_custom_call.1} parent=5 // pred_check_branch
      %195 = sbr.rel (%p192) target = $region48
    $region47: #{tpu_custom_call.1} parent=5 // pred_region
      %s196 = scalar_lea.sflag [#allocation4], %s35
      %s197 = smul.u32 32, 1
      %s198 = sshll.u32 %s197, 4
      %199 = dma.done %s196, %s198
    $region48: #{tpu_custom_call.1} parent=5 // pred_fallthru
      _
  $region6: #{tpu_custom_call.1} parent=0 // loop_footer
    %s21 = sadd.s32 1, %s17
  $region7: #{tpu_custom_call.1} parent=0 // loop_footer_branch
    %16 = sbr.rel target = $region3
  $region8: #{tpu_custom_call.1} parent=0 // loop_exit
    _
  %200 = vsyncmov [#allocation3]
  %s201 = vpop.sfrf %200
  %p202 = scmp.eq.s32.totalorder %s201, 0
  %p203 = pneg %p202
  %205 = shalt.err (%p203)
  %s206 = scalar_lea.sflag [#allocation3], 1
  %207 = vsyncmov %s206
  %s208 = vpop.sfrf %207
  %p209 = scmp.eq.s32.totalorder %s208, 0
  %p210 = pneg %p209
  %212 = shalt.err (%p210)
  %213 = vsyncmov [#allocation4]
  %s214 = vpop.sfrf %213
  %p215 = scmp.eq.s32.totalorder %s214, 0
  %p216 = pneg %p215
  %218 = shalt.err (%p216)
  %s219 = scalar_lea.sflag [#allocation4], 1
  %220 = vsyncmov %s219
  %s221 = vpop.sfrf %220
  %p222 = scmp.eq.s32.totalorder %s221, 0
  %p223 = pneg %p222
  %225 = shalt.err (%p223)

</llo_original>
